<compile_context>
chip_gen: v7x
topology: tpu7x:2x2x1
jax: 0.10.0
libtpu: 0.0.40
codegen_flags: <defaults>
</compile_context>

<pallas_src>
import jax
import jax.numpy as jnp
from jax.experimental import pallas as pl
from jax.experimental.pallas import tpu as pltpu


def _abs_pos_enc_kernel(x_ref, o_ref):
    # x_ref / o_ref: (1, TT, W) slab — one batch element, TT sequence rows,
    # only the first W (<= 128) feature lanes are DMA'd.
    tt = x_ref.shape[1]
    t_off = pl.program_id(1) * tt  # absolute sequence offset of this tile

    # Pass the untouched lanes of the slab straight through.
    o_ref[...] = x_ref[...]

    # Absolute position index: int32 iota + a single cast (cheap native path),
    # written only to feature lane 0.
    pos = t_off + jax.lax.broadcasted_iota(jnp.int32, (1, tt, 1), 1)
    o_ref[:, :, pl.ds(0, 1)] = pos.astype(o_ref.dtype)


def _abs_pos_enc_call(x: jax.Array) -> jax.Array:
    B, T, D = x.shape

    # Only feature lane 0 changes; never move more than one 128-lane slab.
    W = D if D <= 128 else 128
    # Sequence tile: big enough to amortize per-step overhead, small enough to
    # be VMEM-safe on every generation (v7x's 64 MiB included).
    TT = T if T <= 2048 else 2048
    grid = (B, pl.cdiv(T, TT))

    cost = pl.CostEstimate(
        flops=0,
        transcendentals=0,
        bytes_accessed=2 * B * T * W * x.dtype.itemsize,
    )

    return pl.pallas_call(
        _abs_pos_enc_kernel,
        out_shape=jax.ShapeDtypeStruct((B, T, D), x.dtype),
        grid=grid,
        in_specs=[pl.BlockSpec((1, TT, W), lambda b, t: (b, t, 0))],
        out_specs=pl.BlockSpec((1, TT, W), lambda b, t: (b, t, 0)),
        input_output_aliases={0: 0},  # lanes >= W stay valid in-place
        compiler_params=pltpu.CompilerParams(
            dimension_semantics=("parallel", "parallel"),
        ),
        cost_estimate=cost,
    )(x)


# Donate x so the input/output alias avoids a defensive copy — this mirrors the
# in-place mutation semantics of the PyTorch module.
absolute_positional_encoding = jax.jit(_abs_pos_enc_call, donate_argnums=(0,))


if __name__ == "__main__":
    key = jax.random.PRNGKey(0)
    B, T, D = 2, 8, 32
    x = jax.random.normal(key, (B, T, D), dtype=jnp.float32)

    # Pure-JAX reference of the PyTorch forward.  Computed BEFORE the kernel
    # call because x's buffer is donated to (and aliased by) the kernel.
    # Note: positions are written in x.dtype, matching PyTorch (low-precision
    # dtypes round large position indices for very long sequences).
    ref = x.at[:, :, 0].set(
        jnp.broadcast_to(jnp.arange(T, dtype=x.dtype), (B, T))
    )
    ref = jax.block_until_ready(ref)

    out = absolute_positional_encoding(x)
    out = jax.block_until_ready(out)

    assert out.shape == (B, T, D) and out.dtype == ref.dtype
    assert jnp.allclose(out, ref), "mismatch vs reference"
    print("KERNEL_OK")
</pallas_src>

<mosaic_0001>
module attributes {stable_mosaic.version = 11 : i64} {
  func.func @_abs_pos_enc_kernel(%arg0: i32, %arg1: i32, %arg2: memref<1x8x32xf32, #tpu.memory_space<vmem>>, %arg3: memref<1x8x32xf32, #tpu.memory_space<vmem>>) attributes {dimension_semantics = [#tpu.dimension_semantics<parallel>, #tpu.dimension_semantics<parallel>], iteration_bounds = array<i64: 2, 1>, scalar_prefetch = 0 : i64, scratch_operands = 0 : i64, tpu.core_type = #tpu.core_type<tc>, window_params = [{transform_indices = @transform_0, window_bounds = array<i64: 1, 8, 32>}, {transform_indices = @transform_1, window_bounds = array<i64: 1, 8, 32>}]} {
    %c8_i32 = arith.constant 8 : i32
    %0 = arith.muli %arg1, %c8_i32 : i32
    %c0 = arith.constant 0 : index
    %c0_0 = arith.constant 0 : index
    %c0_1 = arith.constant 0 : index
    %1 = vector.load %arg2[%c0, %c0_0, %c0_1] : memref<1x8x32xf32, #tpu.memory_space<vmem>>, vector<1x8x32xf32>
    %c0_2 = arith.constant 0 : index
    %c0_3 = arith.constant 0 : index
    %c0_4 = arith.constant 0 : index
    %2 = vector.load %arg3[%c0_2, %c0_3, %c0_4] : memref<1x8x32xf32, #tpu.memory_space<vmem>>, vector<1x8x32xf32>
    tpu.vector_store %arg3[%c0_2, %c0_3, %c0_4], %1 {strides = array<i32>} : memref<1x8x32xf32, #tpu.memory_space<vmem>>, vector<1x8x32xf32>,
    %3 = tpu.iota {dimensions = array<i32: 1>} : vector<1x8x1xi32>
    %4 = vector.broadcast %0 : i32 to vector<1x8x1xi32>
    %5 = arith.addi %4, %3 : vector<1x8x1xi32>
    %6 = arith.sitofp %5 : vector<1x8x1xi32> to vector<1x8x1xf32>
    %c0_5 = arith.constant 0 : index
    %c0_6 = arith.constant 0 : index
    %c0_7 = arith.constant 0 : index
    %7 = vector.load %arg3[%c0_5, %c0_6, %c0_7] : memref<1x8x32xf32, #tpu.memory_space<vmem>>, vector<1x8x1xf32>
    tpu.vector_store %arg3[%c0_5, %c0_6, %c0_7], %6 {strides = array<i32>} : memref<1x8x32xf32, #tpu.memory_space<vmem>>, vector<1x8x1xf32>,
    return
  }
  func.func @transform_0(%arg0: i32, %arg1: i32) -> (i32, i32, i32) {
    %c0_i32 = arith.constant 0 : i32
    %c0_i32_0 = arith.constant 0 : i32
    return %arg0, %arg1, %c0_i32 : i32, i32, i32
  }
  func.func @transform_1(%arg0: i32, %arg1: i32) -> (i32, i32, i32) {
    %c0_i32 = arith.constant 0 : i32
    %c0_i32_0 = arith.constant 0 : i32
    return %arg0, %arg1, %c0_i32 : i32, i32, i32
  }
}

</mosaic_0001>

<llo_original>
// kernel: _abs_pos_enc_call.1
$region0: #{_abs_pos_enc_call.1}
  #allocation0 [shape = 'u32[]', space=smem, size = 0x4, offset = 0x4, fixed_abs, tag = 'smem constant byte address 0x4 - core index']
  #allocation1 [shape = 'u32[144,128]{1,0:T(1,128)}', space=vmem, size = 0x12000, scoped, tag = 'internal scratch']
  %s0 = inlined_call_operand.hbm [shape: f32[2,8,32], index: 0, kind: input, shape index: {}, may-alias: {0,1}]
  %s1 = inlined_call_operand.hbm [shape: f32[2,8,32], index: 1, kind: output, shape index: {}, may-alias: {0,1}]
  %s2 = sld [smem:[#allocation0]]
  $region41: #{_abs_pos_enc_call.1} parent=0
    _
  %s4 = ssub.s32 1, %s2
  %s5 = scalar_select 0, %s4, %s2
  $region1: #{_abs_pos_enc_call.1} parent=0
    #allocation2 [shape = 'u8[8192]{0}', space=vmem, size = 0x2000, scoped, tag = 'input window, operand 0']
    #allocation3 [shape = 's32[2]{0}', space=sflag, size = 0x8, scoped, tag = 'scoped memory for _abs_pos_enc_call.1']
    #allocation4 [shape = 's32[2]{0}', space=sflag, size = 0x8, scoped, tag = 'scoped memory for _abs_pos_enc_call.1']
    #allocation5 [shape = 'u8[8192]{0}', space=vmem, size = 0x2000, scoped, tag = 'output window, operand 0']
    %6 = vsyncpa [#allocation3], 0
    %s7 = scalar_lea.sflag [#allocation3], 1
    %8 = vsyncpa %s7, 0
    %9 = vsyncpa [#allocation4], 0
    %s10 = scalar_lea.sflag [#allocation4], 1
    %11 = vsyncpa %s10, 0
    loop: start=0, step=1, limit=4
    $region2: #{_abs_pos_enc_call.1} parent=1 // loop_pre_header
      _
    $region3: #{_abs_pos_enc_call.1} parent=1 // loop_header
      %s13 = sphi 0, %s17
      %p14 = scmp.ge.s32.totalorder %s13, 4
      %s20 = sphi 0, %s32
      %s21 = sphi 0, %s28
      %s22 = sphi 0, %s20
      %s23 = sphi 0, %s21
      %s24 = sphi 0, %s22
      %s25 = sphi 0, %s23
      %s37 = sphi 0, %s39
      %s40 = sphi 0, %s37
      %s41 = sphi 0, %s40
      %s57 = sphi 0, %s41
      %s65 = sphi 0, %s67
      %s68 = sphi 0, %s65
      %s69 = sphi 0, %s68
      %s85 = sphi 0, %s69
    $region4: #{_abs_pos_enc_call.1} parent=1 // loop_header_branch
      %16 = sbr.rel (%p14) target = $region8
    $region5: #{_abs_pos_enc_call.1} parent=1 // loop_body
      %s18 = ssub.s32 %s13, 1
      %s19 = ssub.s32 %s13, 2
      %s26 = sadd.s32 1, %s21
      %p27 = scmp.ge.s32.totalorder %s26, 1
      %s28 = scalar_select %p27, 0, %s26
      %s29 = sadd.s32 1, %s20
      %s30 = scalar_select %p27, %s29, %s20
      %p31 = scmp.ge.s32.totalorder %s30, 2
      %s32 = scalar_select %p31, 0, %s30
      %s33 = ssub.s32 %s20, %s32
      %s34 = ssub.s32 %s21, %s28
      %s35 = sor.u32 %s33, %s34
      %p36 = scmp.eq.s32.totalorder %s35, 0
      %s38 = sadd.s32 %s37, 1
      %s39 = scalar_select %p36, %s37, %s38
      %p42 = pneg %p36
      %p43 = scmp.eq.s32.totalorder %s13, 1
      %p44 = por %p42, %p43
      %p45 = scmp.ne.s32.totalorder %s37, %s40
      %p46 = scmp.eq.s32.totalorder %s13, 0
      %p47 = por %p45, %p46
      %p48 = scmp.ne.s32.totalorder %s37, %s40
      %p49 = scmp.eq.s32.totalorder %s18, 1
      %p50 = por %p48, %p49
      %p51 = scmp.ne.s32.totalorder %s40, %s41
      %p52 = scmp.eq.s32.totalorder %s18, 0
      %p53 = por %p51, %p52
      %p54 = scmp.ne.s32.totalorder %s40, %s41
      %p55 = scmp.eq.s32.totalorder %s19, 1
      %p56 = por %p54, %p55
      %p58 = scmp.ne.s32.totalorder %s41, %s57
      %p59 = scmp.eq.s32.totalorder %s19, 0
      %p60 = por %p58, %p59
      %s61 = ssub.s32 %s20, %s32
      %s62 = ssub.s32 %s21, %s28
      %s63 = sor.u32 %s61, %s62
      %p64 = scmp.eq.s32.totalorder %s63, 0
      %s66 = sadd.s32 %s65, 1
      %s67 = scalar_select %p64, %s65, %s66
      %p70 = pneg %p64
      %p71 = scmp.eq.s32.totalorder %s13, 1
      %p72 = por %p70, %p71
      %p73 = scmp.ne.s32.totalorder %s65, %s68
      %p74 = scmp.eq.s32.totalorder %s13, 0
      %p75 = por %p73, %p74
      %p76 = scmp.ne.s32.totalorder %s65, %s68
      %p77 = scmp.eq.s32.totalorder %s18, 1
      %p78 = por %p76, %p77
      %p79 = scmp.ne.s32.totalorder %s68, %s69
      %p80 = scmp.eq.s32.totalorder %s18, 0
      %p81 = por %p79, %p80
      %p82 = scmp.ne.s32.totalorder %s68, %s69
      %p83 = scmp.eq.s32.totalorder %s19, 1
      %p84 = por %p82, %p83
      %p86 = scmp.ne.s32.totalorder %s69, %s85
      %p87 = scmp.eq.s32.totalorder %s19, 0
      %p88 = por %p86, %p87
      %p89 = scmp.le.s32.totalorder 1, %s13
      %p90 = scmp.lt.s32.totalorder %s13, 3
      %p91 = pnand %p89, %p90
      %p92 = pneg %p91
      // Predicated region
      $region9: #{_abs_pos_enc_call.1} parent=5 // pred_check
        _
      $region10: #{_abs_pos_enc_call.1} parent=5 // pred_check_branch
        %94 = sbr.rel (%p91) target = $region12
      $region11: #{_abs_pos_enc_call.1} parent=5 // pred_region
        %s95 = ssub.s32 %s13, 1
      $region12: #{_abs_pos_enc_call.1} parent=5 // pred_fallthru
        _
      %p96 = scmp.lt.s32.totalorder %s13, 2
      // Predicated region
      $region13: #{_abs_pos_enc_call.1} parent=5 // pred_check
        %p97 = pneg %p96
      $region14: #{_abs_pos_enc_call.1} parent=5 // pred_check_branch
        %99 = sbr.rel (%p97) target = $region16
      $region15: #{_abs_pos_enc_call.1} parent=5 // pred_region
        // Predicated region
        $region17: #{_abs_pos_enc_call.1} parent=15 // pred_check
          %p100 = pneg %p47
        $region18: #{_abs_pos_enc_call.1} parent=15 // pred_check_branch
          %102 = sbr.rel (%p100) target = $region20
        $region19: #{_abs_pos_enc_call.1} parent=15 // pred_region
          %s103 = sand.u32 %s37, 1
          %s104 = scalar_lea.sflag [#allocation3], %s103
          %s105 = sand.u32 %s37, 1
          %s106 = smul.addr %s105, 8
          %s107 = scalar_lea.vmem [#allocation2], %s106
          %s109 = ssub.s32 128, 128
          %110 = vsyncadd %s104, %s109
          %s111 = sadd.s32 %s21, %s20
          %s112 = smul.addr %s111, 128
          %s113 = scalar_lea.hbm %s0, %s112
          %s115 = sshll.u32 %s107, 4
          %s116 = int_to_ptr.vmem [resolvable:$true] %s115
          %118 = dma.hbm_to_vmem [thread:$0]  %s113, 128, %s116, %s104
        $region20: #{_abs_pos_enc_call.1} parent=15 // pred_fallthru
          _
      $region16: #{_abs_pos_enc_call.1} parent=5 // pred_fallthru
        _
      %p119 = scmp.le.s32.totalorder 1, %s13
      %p120 = scmp.lt.s32.totalorder %s13, 3
      %p121 = pnand %p119, %p120
      %p122 = pneg %p121
      // Predicated region
      $region21: #{_abs_pos_enc_call.1} parent=5 // pred_check
        _
      $region22: #{_abs_pos_enc_call.1} parent=5 // pred_check_branch
        %124 = sbr.rel (%p121) target = $region24
      $region23: #{_abs_pos_enc_call.1} parent=5 // pred_region
        %s125 = ssub.s32 %s13, 1
        %s126 = sand.u32 %s40, 1
        %s127 = scalar_lea.sflag [#allocation3], %s126
        %s128 = sand.u32 %s40, 1
        %s129 = smul.addr %s128, 8
        %s130 = scalar_lea.vmem [#allocation2], %s129
        // Predicated region
        $region25: #{_abs_pos_enc_call.1} parent=23 // pred_check
          %p131 = pneg %p53
        $region26: #{_abs_pos_enc_call.1} parent=23 // pred_check_branch
          %133 = sbr.rel (%p131) target = $region28
        $region27: #{_abs_pos_enc_call.1} parent=23 // pred_region
          %134 = dma.done %s127, 128
        $region28: #{_abs_pos_enc_call.1} parent=23 // pred_fallthru
          _
        %s135 = sand.u32 %s40, 1
        %s136 = scalar_lea.sflag [#allocation3], %s135
        %s137 = sand.u32 %s40, 1
        %s138 = smul.addr %s137, 8
        %s139 = scalar_lea.vmem [#allocation2], %s138
        %p140 = pneg %p53
        %p141 = pneg %p50
        %p142 = pneg %p81
        %p143 = pneg %p78
        %s144 = sand.u32 %s68, 1
        %s145 = scalar_lea.sflag [#allocation4], %s144
        %s146 = sand.u32 %s68, 1
        %s147 = smul.addr %s146, 8
        %s148 = scalar_lea.vmem [#allocation5], %s147
        %s149 = smul.u32 %s23, 8
        %v150 = vld [vmem:[%s130] sm:$0xff]
        %vm151 = vcmask 261120
        %152 = vst.msk [vmem:[%s148] sm:$0xff] %vm151, %v150
        %v153 = vlaneseq
        %v154 = vshrl.u32 %v153, 7
        %v155 = vstv %s149
        %v156 = vadd.s32 %v155, %v154
        %v157 = vcvt.s32.f32 %v156
        %vm158 = vcmask 7168
        %159 = vst.msk [vmem:[%s148] sm:$0xff] %vm158, %v157
        %s160 = sand.u32 %s68, 1
        %s161 = scalar_lea.sflag [#allocation4], %s160
        %s162 = sand.u32 %s68, 1
        %s163 = smul.addr %s162, 8
        %s164 = scalar_lea.vmem [#allocation5], %s163
        // Predicated region
        $region29: #{_abs_pos_enc_call.1} parent=23 // pred_check
          %p165 = pneg %p78
        $region30: #{_abs_pos_enc_call.1} parent=23 // pred_check_branch
          %167 = sbr.rel (%p165) target = $region32
        $region31: #{_abs_pos_enc_call.1} parent=23 // pred_region
          %s169 = ssub.s32 128, 128
          %170 = vsyncadd %s161, %s169
          %s171 = sadd.s32 %s23, %s22
          %s172 = smul.addr %s171, 128
          %s173 = scalar_lea.hbm %s1, %s172
          %s175 = sshll.u32 %s164, 4
          %s176 = int_to_ptr.vmem [resolvable:$true] %s175
          %178 = dma.vmem_to_hbm [thread:$0]  %s176, 128, %s173, %s161
        $region32: #{_abs_pos_enc_call.1} parent=23 // pred_fallthru
          _
      $region24: #{_abs_pos_enc_call.1} parent=5 // pred_fallthru
        _
      %p179 = scmp.le.s32.totalorder 2, %s13
      // Predicated region
      $region33: #{_abs_pos_enc_call.1} parent=5 // pred_check
        %p180 = pneg %p179
      $region34: #{_abs_pos_enc_call.1} parent=5 // pred_check_branch
        %182 = sbr.rel (%p180) target = $region36
      $region35: #{_abs_pos_enc_call.1} parent=5 // pred_region
        %s183 = ssub.s32 %s13, 2
        // Predicated region
        $region37: #{_abs_pos_enc_call.1} parent=35 // pred_check
          %p184 = pneg %p84
        $region38: #{_abs_pos_enc_call.1} parent=35 // pred_check_branch
          %186 = sbr.rel (%p184) target = $region40
        $region39: #{_abs_pos_enc_call.1} parent=35 // pred_region
          %s187 = sand.u32 %s69, 1
          %s188 = scalar_lea.sflag [#allocation4], %s187
          %s189 = sand.u32 %s69, 1
          %s190 = smul.addr %s189, 8
          %s191 = scalar_lea.vmem [#allocation5], %s190
          %192 = dma.done %s188, 128
        $region40: #{_abs_pos_enc_call.1} parent=35 // pred_fallthru
          _
      $region36: #{_abs_pos_enc_call.1} parent=5 // pred_fallthru
        _
    $region6: #{_abs_pos_enc_call.1} parent=1 // loop_footer
      %s17 = sadd.s32 1, %s13
    $region7: #{_abs_pos_enc_call.1} parent=1 // loop_footer_branch
      %12 = sbr.rel target = $region3
    $region8: #{_abs_pos_enc_call.1} parent=1 // loop_exit
      _
    %193 = vsyncpa [#allocation3], 1
    %s194 = scalar_lea.sflag [#allocation3], 1
    %195 = vsyncpa %s194, 1
    %196 = vsyncpa [#allocation4], 1
    %s197 = scalar_lea.sflag [#allocation4], 1
    %198 = vsyncpa %s197, 1

</llo_original>
